<compile_context>
chip_gen: v7x
topology: tpu7x:2x2x1
jax: 0.10.0
libtpu: 0.0.40
codegen_flags: <defaults>
</compile_context>

<pallas_src>
import jax
import jax.numpy as jnp
from jax import lax
from jax.experimental import pallas as pl
from jax.experimental.pallas import tpu as pltpu

LANES = 512                      # lane-dim width (multiple of 128)
MAX_BLOCK_ROWS = 4096            # 4096 x 512 x 4B = 8 MiB f32 per input block
N_PARALLEL = 2                   # leading "parallel" grid axis (2 TCs on v7x)
VMEM_LIMIT = 48 * 1024 * 1024    # fits v7x 64 MiB/TC; above v5e's 16 MiB default


def _make_dice_kernel(block_rows: int, steps_per_core: int,
                      valid_rows: int, any_partial: bool):
    """Build the kernel with static block geometry closed over."""

    def kernel(pred_ref, tgt_ref, prod_ref, sum_ref):
        c = pl.program_id(0)      # parallel (core) axis
        i = pl.program_id(1)      # sequential block stream per core

        @pl.when(i == 0)
        def _init():
            prod_ref[...] = jnp.zeros_like(prod_ref)
            sum_ref[...] = jnp.zeros_like(sum_ref)

        # Stream native dtype from HBM; accumulate in f32 on the VPU.
        p = pred_ref[...].astype(jnp.float32)
        t = tgt_ref[...].astype(jnp.float32)

        def accumulate(pv, tv):
            # Sublane-only partial reductions into lane-shaped f32 partials.
            # sum(t) + sum(p) == sum(t + p): avoids a full-size (t + p) temp.
            prod_ref[...] += jnp.sum(tv * pv, axis=0, keepdims=True)[None]
            sum_ref[...] += (jnp.sum(tv, axis=0, keepdims=True)
                             + jnp.sum(pv, axis=0, keepdims=True))[None]

        if any_partial:
            # Only emitted when some block can overhang the data (static check).
            block_start = (c * steps_per_core + i) * block_rows
            is_full = block_start + block_rows <= valid_rows

            @pl.when(is_full)
            def _full_block():        # fast path: no mask work
                accumulate(p, t)

            @pl.when(jnp.logical_not(is_full))
            def _tail_block():        # ragged last block / phantom block only
                row_ids = block_start + lax.broadcasted_iota(
                    jnp.int32, (block_rows, LANES), 0)
                valid = row_ids < valid_rows
                accumulate(jnp.where(valid, p, 0.0), jnp.where(valid, t, 0.0))
        else:
            accumulate(p, t)

    return kernel


def dice_loss(output: jax.Array, target: jax.Array, *, block_rows=None) -> jax.Array:
    """Dice loss over all elements; returns a float32 scalar."""
    assert output.shape == target.shape
    n = output.size
    assert n > 0

    p = output.reshape(-1)        # keep native dtype (bf16 / int8 fine)
    t = target.reshape(-1)

    rows = (n + LANES - 1) // LANES
    n_pad = rows * LANES
    if n_pad != n:                # trace-time check; zero padding is sum-neutral
        p = jnp.pad(p, (0, n_pad - n))
        t = jnp.pad(t, (0, n_pad - n))
    p2 = p.reshape(rows, LANES)
    t2 = t.reshape(rows, LANES)

    if block_rows is None:
        block_rows = MAX_BLOCK_ROWS
    if block_rows >= rows:
        block_rows = rows          # single full-extent block
    else:
        assert block_rows % 8 == 0, "block_rows must be a multiple of 8"

    total_blocks = (rows + block_rows - 1) // block_rows
    n_parallel = N_PARALLEL if total_blocks >= N_PARALLEL else 1
    steps_per_core = (total_blocks + n_parallel - 1) // n_parallel
    # Mask path needed iff some grid block overhangs the real rows
    # (ragged last block and/or phantom blocks from the 2-way core split).
    any_partial = (n_parallel * steps_per_core * block_rows != rows)

    def in_map(c, i):
        idx = c * steps_per_core + i
        # Clamp phantom blocks onto the last real block (their contribution is
        # masked to zero in-kernel); keeps every DMA window in bounds.
        return (jnp.minimum(idx, total_blocks - 1), 0)

    kernel = _make_dice_kernel(block_rows, steps_per_core, rows, any_partial)

    prod_part, sum_part = pl.pallas_call(
        kernel,
        out_shape=(
            jax.ShapeDtypeStruct((n_parallel, 1, LANES), jnp.float32),
            jax.ShapeDtypeStruct((n_parallel, 1, LANES), jnp.float32),
        ),
        grid_spec=pltpu.PrefetchScalarGridSpec(
            num_scalar_prefetch=0,
            grid=(n_parallel, steps_per_core),
            in_specs=[
                pl.BlockSpec((block_rows, LANES), in_map),
                pl.BlockSpec((block_rows, LANES), in_map),
            ],
            out_specs=[
                pl.BlockSpec((1, 1, LANES), lambda c, i: (c, 0, 0)),
                pl.BlockSpec((1, 1, LANES), lambda c, i: (c, 0, 0)),
            ],
        ),
        compiler_params=pltpu.CompilerParams(
            dimension_semantics=("parallel", "arbitrary"),
            vmem_limit_bytes=VMEM_LIMIT,
        ),
    )(p2, t2)

    # Tiny final reduction + loss math in plain JAX (n_parallel x 512 f32 each).
    inter = jnp.sum(prod_part)
    denom = jnp.sum(sum_part)
    # Matches the PyTorch module exactly: no smooth epsilon.
    return (1.0 - 2.0 * inter / denom).astype(jnp.float32)


def dice_loss_ref(output, target):
    output = output.astype(jnp.float32)
    target = target.astype(jnp.float32)
    inter = jnp.sum(target * output)
    return 1.0 - 2.0 * inter / (jnp.sum(target) + jnp.sum(output))


if __name__ == "__main__":
    key = jax.random.PRNGKey(0)
    k1, k2, k3, k4, k5, k6 = jax.random.split(key, 6)

    # 1) Segmentation-style NCHW input, single full-extent block fast path.
    shape = (2, 4, 16, 16)
    pred = jax.nn.sigmoid(jax.random.normal(k1, shape, dtype=jnp.float32))
    tgt = (jax.random.uniform(k2, shape) > 0.5).astype(jnp.float32)
    loss = dice_loss(pred, tgt)
    jax.block_until_ready(loss)
    ref = dice_loss_ref(pred, tgt)
    assert jnp.allclose(loss, ref, atol=1e-5, rtol=1e-5), (loss, ref)

    # 2) Odd element count -> lane-padding path.
    shape2 = (2, 3, 7, 5)
    pred2 = jax.nn.sigmoid(jax.random.normal(k3, shape2, dtype=jnp.float32))
    tgt2 = (jax.random.uniform(k4, shape2) > 0.5).astype(jnp.float32)
    loss2 = dice_loss(pred2, tgt2)
    jax.block_until_ready(loss2)
    ref2 = dice_loss_ref(pred2, tgt2)
    assert jnp.allclose(loss2, ref2, atol=1e-5, rtol=1e-5), (loss2, ref2)

    # 3) Multi-block stream, 2-way core split, ragged last block AND a phantom
    #    block, forced at small size via the block_rows override
    #    (8448 elems -> 17 rows of 512 -> 3 real blocks of 8 rows -> grid (2,2)).
    shape3 = (2, 4, 32, 33)
    pred3 = jax.nn.sigmoid(jax.random.normal(k5, shape3, dtype=jnp.float32))
    tgt3 = (jax.random.uniform(k6, shape3) > 0.5).astype(jnp.float32)
    loss3 = dice_loss(pred3, tgt3, block_rows=8)
    jax.block_until_ready(loss3)
    ref3 = dice_loss_ref(pred3, tgt3)
    assert jnp.allclose(loss3, ref3, atol=1e-5, rtol=1e-5), (loss3, ref3)

    # 4) Reduced-precision inputs (bf16) stream half the HBM bytes; the kernel
    #    casts to f32 in VMEM so no wrapper-side cast pass is needed.
    pred4 = pred.astype(jnp.bfloat16)
    tgt4 = tgt.astype(jnp.bfloat16)
    loss4 = dice_loss(pred4, tgt4)
    jax.block_until_ready(loss4)
    ref4 = dice_loss_ref(pred4, tgt4)
    assert jnp.allclose(loss4, ref4, atol=1e-4, rtol=1e-4), (loss4, ref4)

    print("KERNEL_OK")
</pallas_src>

<mosaic_0001>
module attributes {stable_mosaic.version = 11 : i64} {
  func.func @kernel(%arg0: i32, %arg1: i32, %arg2: memref<4x512xf32, #tpu.memory_space<vmem>>, %arg3: memref<4x512xf32, #tpu.memory_space<vmem>>, %arg4: memref<1x1x512xf32, #tpu.memory_space<vmem>>, %arg5: memref<1x1x512xf32, #tpu.memory_space<vmem>>) attributes {dimension_semantics = [#tpu.dimension_semantics<parallel>, #tpu.dimension_semantics<arbitrary>], iteration_bounds = array<i64: 1, 1>, scalar_prefetch = 0 : i64, scratch_operands = 0 : i64, tpu.core_type = #tpu.core_type<tc>, window_params = [{transform_indices = @transform_0, window_bounds = array<i64: 4, 512>}, {transform_indices = @transform_1, window_bounds = array<i64: 4, 512>}, {transform_indices = @transform_2, window_bounds = array<i64: 1, 1, 512>}, {transform_indices = @transform_3, window_bounds = array<i64: 1, 1, 512>}]} {
    %c0_i32 = arith.constant 0 : i32
    %0 = arith.cmpi eq, %arg1, %c0_i32 : i32
    %1 = arith.extui %0 : i1 to i32
    %c0_i32_0 = arith.constant 0 : i32
    %2 = arith.cmpi ne, %1, %c0_i32_0 : i32
    scf.if %2 {
      %cst_18 = arith.constant 0.000000e+00 : f32
      %21 = vector.broadcast %cst_18 : f32 to vector<1x1x512xf32>
      %c0_19 = arith.constant 0 : index
      %c0_20 = arith.constant 0 : index
      %c0_21 = arith.constant 0 : index
      %22 = vector.load %arg4[%c0_19, %c0_20, %c0_21] : memref<1x1x512xf32, #tpu.memory_space<vmem>>, vector<1x1x512xf32>
      tpu.vector_store %arg4[%c0_19, %c0_20, %c0_21], %21 {strides = array<i32>} : memref<1x1x512xf32, #tpu.memory_space<vmem>>, vector<1x1x512xf32>,
      %cst_22 = arith.constant 0.000000e+00 : f32
      %23 = vector.broadcast %cst_22 : f32 to vector<1x1x512xf32>
      %c0_23 = arith.constant 0 : index
      %c0_24 = arith.constant 0 : index
      %c0_25 = arith.constant 0 : index
      %24 = vector.load %arg5[%c0_23, %c0_24, %c0_25] : memref<1x1x512xf32, #tpu.memory_space<vmem>>, vector<1x1x512xf32>
      tpu.vector_store %arg5[%c0_23, %c0_24, %c0_25], %23 {strides = array<i32>} : memref<1x1x512xf32, #tpu.memory_space<vmem>>, vector<1x1x512xf32>,
    } else {
    }
    %c0 = arith.constant 0 : index
    %c0_1 = arith.constant 0 : index
    %3 = vector.load %arg2[%c0, %c0_1] : memref<4x512xf32, #tpu.memory_space<vmem>>, vector<4x512xf32>
    %c0_2 = arith.constant 0 : index
    %c0_3 = arith.constant 0 : index
    %4 = vector.load %arg3[%c0_2, %c0_3] : memref<4x512xf32, #tpu.memory_space<vmem>>, vector<4x512xf32>
    %c0_4 = arith.constant 0 : index
    %c0_5 = arith.constant 0 : index
    %c0_6 = arith.constant 0 : index
    %5 = vector.load %arg4[%c0_4, %c0_5, %c0_6] : memref<1x1x512xf32, #tpu.memory_space<vmem>>, vector<1x1x512xf32>
    %6 = arith.mulf %4, %3 : vector<4x512xf32>
    %cst = arith.constant dense<0.000000e+00> : vector<512xf32>
    %7 = vector.multi_reduction <add>, %6, %cst [0] : vector<4x512xf32> to vector<512xf32>
    %8 = vector.shape_cast %7 : vector<512xf32> to vector<1x512xf32>
    %9 = vector.shape_cast %8 : vector<1x512xf32> to vector<1x1x512xf32>
    %10 = arith.addf %5, %9 : vector<1x1x512xf32>
    %c0_7 = arith.constant 0 : index
    %c0_8 = arith.constant 0 : index
    %c0_9 = arith.constant 0 : index
    %11 = vector.load %arg4[%c0_7, %c0_8, %c0_9] : memref<1x1x512xf32, #tpu.memory_space<vmem>>, vector<1x1x512xf32>
    tpu.vector_store %arg4[%c0_7, %c0_8, %c0_9], %10 {strides = array<i32>} : memref<1x1x512xf32, #tpu.memory_space<vmem>>, vector<1x1x512xf32>,
    %c0_10 = arith.constant 0 : index
    %c0_11 = arith.constant 0 : index
    %c0_12 = arith.constant 0 : index
    %12 = vector.load %arg5[%c0_10, %c0_11, %c0_12] : memref<1x1x512xf32, #tpu.memory_space<vmem>>, vector<1x1x512xf32>
    %cst_13 = arith.constant dense<0.000000e+00> : vector<512xf32>
    %13 = vector.multi_reduction <add>, %4, %cst_13 [0] : vector<4x512xf32> to vector<512xf32>
    %14 = vector.shape_cast %13 : vector<512xf32> to vector<1x512xf32>
    %cst_14 = arith.constant dense<0.000000e+00> : vector<512xf32>
    %15 = vector.multi_reduction <add>, %3, %cst_14 [0] : vector<4x512xf32> to vector<512xf32>
    %16 = vector.shape_cast %15 : vector<512xf32> to vector<1x512xf32>
    %17 = arith.addf %14, %16 : vector<1x512xf32>
    %18 = vector.shape_cast %17 : vector<1x512xf32> to vector<1x1x512xf32>
    %19 = arith.addf %12, %18 : vector<1x1x512xf32>
    %c0_15 = arith.constant 0 : index
    %c0_16 = arith.constant 0 : index
    %c0_17 = arith.constant 0 : index
    %20 = vector.load %arg5[%c0_15, %c0_16, %c0_17] : memref<1x1x512xf32, #tpu.memory_space<vmem>>, vector<1x1x512xf32>
    tpu.vector_store %arg5[%c0_15, %c0_16, %c0_17], %19 {strides = array<i32>} : memref<1x1x512xf32, #tpu.memory_space<vmem>>, vector<1x1x512xf32>,
    return
  }
  func.func @transform_0(%arg0: i32, %arg1: i32) -> (i32, i32) {
    %c1_i32 = arith.constant 1 : i32
    %0 = arith.muli %arg0, %c1_i32 : i32
    %1 = arith.addi %0, %arg1 : i32
    %c0_i32 = arith.constant 0 : i32
    %2 = arith.minsi %1, %c0_i32 : i32
    %c0_i32_0 = arith.constant 0 : i32
    %c0_i32_1 = arith.constant 0 : i32
    return %2, %c0_i32_0 : i32, i32
  }
  func.func @transform_1(%arg0: i32, %arg1: i32) -> (i32, i32) {
    %c1_i32 = arith.constant 1 : i32
    %0 = arith.muli %arg0, %c1_i32 : i32
    %1 = arith.addi %0, %arg1 : i32
    %c0_i32 = arith.constant 0 : i32
    %2 = arith.minsi %1, %c0_i32 : i32
    %c0_i32_0 = arith.constant 0 : i32
    %c0_i32_1 = arith.constant 0 : i32
    return %2, %c0_i32_0 : i32, i32
  }
  func.func @transform_2(%arg0: i32, %arg1: i32) -> (i32, i32, i32) {
    %c0_i32 = arith.constant 0 : i32
    %c0_i32_0 = arith.constant 0 : i32
    %c0_i32_1 = arith.constant 0 : i32
    return %arg0, %c0_i32, %c0_i32_0 : i32, i32, i32
  }
  func.func @transform_3(%arg0: i32, %arg1: i32) -> (i32, i32, i32) {
    %c0_i32 = arith.constant 0 : i32
    %c0_i32_0 = arith.constant 0 : i32
    %c0_i32_1 = arith.constant 0 : i32
    return %arg0, %c0_i32, %c0_i32_0 : i32, i32, i32
  }
}

</mosaic_0001>

<llo_original>
// kernel: tpu_custom_call.1
$region0: #{tpu_custom_call.1}
  #allocation0 [shape = 'u32[]', space=smem, size = 0x4, offset = 0x4, fixed_abs, tag = 'smem constant byte address 0x4 - core index']
  #allocation1 [shape = 'u32[144,128]{1,0:T(1,128)}', space=vmem, size = 0x12000, scoped, tag = 'internal scratch']
  %s0 = inlined_call_operand.hbm [shape: f32[4,512], index: 0, kind: input, shape index: {}]
  %s1 = inlined_call_operand.hbm [shape: f32[4,512], index: 1, kind: input, shape index: {}]
  %s2 = inlined_call_operand.hbm [shape: f32[1,1,512], index: 2, kind: output, shape index: {0}]
  %s3 = inlined_call_operand.hbm [shape: f32[1,1,512], index: 3, kind: output, shape index: {1}]
  %4 = xla_tuple %s2, %s3
  %s5 = sld [smem:[#allocation0]]
  $region38: #{tpu_custom_call.1} parent=0
    _
  %s7 = ssub.s32 1, %s5
  %s8 = scalar_select 0, %s7, %s5
  $region1: #{tpu_custom_call.1} parent=0
    #allocation2 [shape = 'u8[8192]{0}', space=vmem, size = 0x2000, scoped, tag = 'input window, operand 0, single buffered']
    #allocation3 [shape = 's32[1]{0}', space=sflag, size = 0x4, scoped, tag = 'scoped memory for tpu_custom_call.1']
    #allocation4 [shape = 's32[1]{0}', space=sflag, size = 0x4, scoped, tag = 'scoped memory for tpu_custom_call.1']
    #allocation5 [shape = 'u8[8192]{0}', space=vmem, size = 0x2000, scoped, tag = 'input window, operand 1, single buffered']
    #allocation6 [shape = 's32[1]{0}', space=sflag, size = 0x4, scoped, tag = 'scoped memory for tpu_custom_call.1']
    #allocation7 [shape = 'u8[2048]{0}', space=vmem, size = 0x800, scoped, tag = 'output window, operand 0, single buffered']
    #allocation8 [shape = 'u8[2048]{0}', space=vmem, size = 0x800, scoped, tag = 'output window, operand 1, single buffered']
    #allocation9 [shape = 's32[1]{0}', space=sflag, size = 0x4, scoped, tag = 'scoped memory for tpu_custom_call.1']
    %9 = vsyncpa [#allocation3], 0
    %10 = vsyncpa [#allocation6], 0
    %11 = vsyncpa [#allocation4], 0
    %12 = vsyncpa [#allocation9], 0
    // Predicated region
    $region2: #{tpu_custom_call.1} parent=1 // pred_check
      _
    $region3: #{tpu_custom_call.1} parent=1 // pred_check_branch
      %14 = sbr.rel (0) target = $region5
    $region4: #{tpu_custom_call.1} parent=1 // pred_region
      %s15 = sadd.s32 0, 0
      %p16 = scmp.lt.s32.totalorder %s15, 0
      %s17 = scalar_select %p16, %s15, 0
      %s19 = ssub.s32 256, 256
      %20 = vsyncadd [#allocation3], %s19
      %s21 = smul.addr %s17, 4
      %s22 = smul.addr %s21, 64
      %s23 = scalar_lea.hbm %s0, %s22
      %s25 = sshll.u32 [#allocation2], 4
      %s26 = int_to_ptr.vmem [resolvable:$true] %s25
      %28 = dma.hbm_to_vmem [thread:$0]  %s23, 256, %s26, [#allocation3]
    $region5: #{tpu_custom_call.1} parent=1 // pred_fallthru
      _
    // Predicated region
    $region6: #{tpu_custom_call.1} parent=1 // pred_check
      _
    $region7: #{tpu_custom_call.1} parent=1 // pred_check_branch
      %30 = sbr.rel (0) target = $region9
    $region8: #{tpu_custom_call.1} parent=1 // pred_region
      %s31 = sadd.s32 0, 0
      %p32 = scmp.lt.s32.totalorder %s31, 0
      %s33 = scalar_select %p32, %s31, 0
      %s35 = ssub.s32 256, 256
      %36 = vsyncadd [#allocation6], %s35
      %s37 = smul.addr %s33, 4
      %s38 = smul.addr %s37, 64
      %s39 = scalar_lea.hbm %s1, %s38
      %s41 = sshll.u32 [#allocation5], 4
      %s42 = int_to_ptr.vmem [resolvable:$true] %s41
      %44 = dma.hbm_to_vmem [thread:$0]  %s39, 256, %s42, [#allocation6]
    $region9: #{tpu_custom_call.1} parent=1 // pred_fallthru
      _
    // Predicated region
    $region10: #{tpu_custom_call.1} parent=1 // pred_check
      _
    $region11: #{tpu_custom_call.1} parent=1 // pred_check_branch
      %46 = sbr.rel (0) target = $region13
    $region12: #{tpu_custom_call.1} parent=1 // pred_region
      %47 = dma.done [#allocation3], 256
    $region13: #{tpu_custom_call.1} parent=1 // pred_fallthru
      _
    // Predicated region
    $region14: #{tpu_custom_call.1} parent=1 // pred_check
      _
    $region15: #{tpu_custom_call.1} parent=1 // pred_check_branch
      %49 = sbr.rel (0) target = $region17
    $region16: #{tpu_custom_call.1} parent=1 // pred_region
      %50 = dma.done [#allocation6], 256
    $region17: #{tpu_custom_call.1} parent=1 // pred_fallthru
      _
    %s51 = sadd.s32 0, 0
    %p52 = scmp.lt.s32.totalorder %s51, 0
    %s53 = scalar_select %p52, %s51, 0
    %s54 = sadd.s32 0, 0
    %p55 = scmp.lt.s32.totalorder %s54, 0
    %s56 = scalar_select %p55, %s54, 0
    %p57 = scmp.eq.s32.totalorder 0, 0
    // Predicated region
    $region18: #{tpu_custom_call.1} parent=1 // pred_check
      %p58 = pneg %p57
    $region19: #{tpu_custom_call.1} parent=1 // pred_check_branch
      %60 = sbr.rel (%p58) target = $region21
    $region20: #{tpu_custom_call.1} parent=1 // pred_region
      %v61 = vlaneseq
      %vm62 = vcmp.ge.s32.totalorder %v61, 0
      %vm63 = vcmp.lt.s32.totalorder %v61, 512
      %vm64 = vmand %vm62, %vm63
      %65 = vst.msk [vmem:[#allocation7] sm:$0xf] %vm64, 0.0
      %66 = vst.msk [vmem:[#allocation8] sm:$0xf] %vm64, 0.0
    $region21: #{tpu_custom_call.1} parent=1 // pred_fallthru
      _
    %v67 = vld [vmem:[#allocation2] sm:$0xff]
    %v68 = vld [vmem:[#allocation2 + $0x8] sm:$0xff]
    %v69 = vld [vmem:[#allocation5] sm:$0xff]
    %v70 = vld [vmem:[#allocation5 + $0x8] sm:$0xff]
    %v71 = vld [vmem:[#allocation7] sm:$0xf]
    %v72 = vmul.f32 %v69, %v67
    %v73 = vmul.f32 %v70, %v68
    %v76 = vcombine.high %v72, %v72
    %v77 = vcombine.high %v73, %v73
    %vm80 = vcmask 1043456
    %v81 = vsel %vm80, %v72, 0.0
    %v82 = vrot.slane %v81, 4
    %v83 = vadd.f32 %v81, %v82
    %v84 = vrot.slane %v83, 2
    %v85 = vadd.f32 %v83, %v84
    %v86 = vrot.slane %v85, 1
    %v87 = vadd.f32 %v85, %v86
    %v88 = vsel %vm80, %v76, 0.0
    %v89 = vrot.slane %v88, 4
    %v90 = vadd.f32 %v88, %v89
    %v91 = vrot.slane %v90, 2
    %v92 = vadd.f32 %v90, %v91
    %v93 = vrot.slane %v92, 1
    %v94 = vadd.f32 %v92, %v93
    %v95 = vsel %vm80, %v73, 0.0
    %v96 = vrot.slane %v95, 4
    %v97 = vadd.f32 %v95, %v96
    %v98 = vrot.slane %v97, 2
    %v99 = vadd.f32 %v97, %v98
    %v100 = vrot.slane %v99, 1
    %v101 = vadd.f32 %v99, %v100
    %v102 = vsel %vm80, %v77, 0.0
    %v103 = vrot.slane %v102, 4
    %v104 = vadd.f32 %v102, %v103
    %v105 = vrot.slane %v104, 2
    %v106 = vadd.f32 %v104, %v105
    %v107 = vrot.slane %v106, 1
    %v108 = vadd.f32 %v106, %v107
    %v113 = vcombine.low %v87, %v94
    %v114 = vcombine.low %v101, %v108
    %v116 = vunpack.c.l.s4 1966171168
    %v117 = vunpack.c.0.s8 %v116
    %v118 = vlaneseq
    %v119 = vshrl.u32 %v118, 7
    %v120 = vsub.s32 %v117, %v119
    %v121 = vrot.slane %v113, %v120
    %v123 = vunpack.c.l.s4 1966171168
    %v124 = vunpack.c.0.s8 %v123
    %v125 = vlaneseq
    %v126 = vshrl.u32 %v125, 7
    %v127 = vsub.s32 %v124, %v126
    %v128 = vrot.slane %v114, %v127
    %v129 = vcombine.low %v121, %v128
    %v131 = vunpack.c.l.s4 1966171168
    %v132 = vunpack.c.0.s8 %v131
    %v133 = vlaneseq
    %v134 = vshrl.u32 %v133, 7
    %v135 = vsub.s32 %v132, %v134
    %v136 = vrot.slane %v129, %v135
    %v138 = vadd.f32 %v71, %v136
    %v139 = vlaneseq
    %vm140 = vcmp.ge.s32.totalorder %v139, 0
    %vm141 = vcmp.lt.s32.totalorder %v139, 512
    %vm142 = vmand %vm140, %vm141
    %143 = vst.msk [vmem:[#allocation7] sm:$0xf] %vm142, %v138
    %v144 = vld [vmem:[#allocation8] sm:$0xf]
    %v147 = vcombine.high %v69, %v69
    %v148 = vcombine.high %v70, %v70
    %v151 = vsel %vm80, %v69, 0.0
    %v152 = vrot.slane %v151, 4
    %v153 = vadd.f32 %v151, %v152
    %v154 = vrot.slane %v153, 2
    %v155 = vadd.f32 %v153, %v154
    %v156 = vrot.slane %v155, 1
    %v157 = vadd.f32 %v155, %v156
    %v158 = vsel %vm80, %v147, 0.0
    %v159 = vrot.slane %v158, 4
    %v160 = vadd.f32 %v158, %v159
    %v161 = vrot.slane %v160, 2
    %v162 = vadd.f32 %v160, %v161
    %v163 = vrot.slane %v162, 1
    %v164 = vadd.f32 %v162, %v163
    %v165 = vsel %vm80, %v70, 0.0
    %v166 = vrot.slane %v165, 4
    %v167 = vadd.f32 %v165, %v166
    %v168 = vrot.slane %v167, 2
    %v169 = vadd.f32 %v167, %v168
    %v170 = vrot.slane %v169, 1
    %v171 = vadd.f32 %v169, %v170
    %v172 = vsel %vm80, %v148, 0.0
    %v173 = vrot.slane %v172, 4
    %v174 = vadd.f32 %v172, %v173
    %v175 = vrot.slane %v174, 2
    %v176 = vadd.f32 %v174, %v175
    %v177 = vrot.slane %v176, 1
    %v178 = vadd.f32 %v176, %v177
    %v181 = vcombine.high %v67, %v67
    %v182 = vcombine.high %v68, %v68
    %v185 = vsel %vm80, %v67, 0.0
    %v186 = vrot.slane %v185, 4
    %v187 = vadd.f32 %v185, %v186
    %v188 = vrot.slane %v187, 2
    %v189 = vadd.f32 %v187, %v188
    %v190 = vrot.slane %v189, 1
    %v191 = vadd.f32 %v189, %v190
    %v192 = vsel %vm80, %v181, 0.0
    %v193 = vrot.slane %v192, 4
    %v194 = vadd.f32 %v192, %v193
    %v195 = vrot.slane %v194, 2
    %v196 = vadd.f32 %v194, %v195
    %v197 = vrot.slane %v196, 1
    %v198 = vadd.f32 %v196, %v197
    %v199 = vsel %vm80, %v68, 0.0
    %v200 = vrot.slane %v199, 4
    %v201 = vadd.f32 %v199, %v200
    %v202 = vrot.slane %v201, 2
    %v203 = vadd.f32 %v201, %v202
    %v204 = vrot.slane %v203, 1
    %v205 = vadd.f32 %v203, %v204
    %v206 = vsel %vm80, %v182, 0.0
    %v207 = vrot.slane %v206, 4
    %v208 = vadd.f32 %v206, %v207
    %v209 = vrot.slane %v208, 2
    %v210 = vadd.f32 %v208, %v209
    %v211 = vrot.slane %v210, 1
    %v212 = vadd.f32 %v210, %v211
    %v213 = vadd.f32 %v157, %v191
    %v214 = vadd.f32 %v164, %v198
    %v215 = vadd.f32 %v171, %v205
    %v216 = vadd.f32 %v178, %v212
    %v221 = vcombine.low %v213, %v214
    %v222 = vcombine.low %v215, %v216
    %v224 = vunpack.c.l.s4 1966171168
    %v225 = vunpack.c.0.s8 %v224
    %v226 = vlaneseq
    %v227 = vshrl.u32 %v226, 7
    %v228 = vsub.s32 %v225, %v227
    %v229 = vrot.slane %v221, %v228
    %v231 = vunpack.c.l.s4 1966171168
    %v232 = vunpack.c.0.s8 %v231
    %v233 = vlaneseq
    %v234 = vshrl.u32 %v233, 7
    %v235 = vsub.s32 %v232, %v234
    %v236 = vrot.slane %v222, %v235
    %v237 = vcombine.low %v229, %v236
    %v239 = vunpack.c.l.s4 1966171168
    %v240 = vunpack.c.0.s8 %v239
    %v241 = vlaneseq
    %v242 = vshrl.u32 %v241, 7
    %v243 = vsub.s32 %v240, %v242
    %v244 = vrot.slane %v237, %v243
    %v246 = vadd.f32 %v144, %v244
    %247 = vst.msk [vmem:[#allocation8] sm:$0xf] %vm142, %v246
    // Predicated region
    $region22: #{tpu_custom_call.1} parent=1 // pred_check
      _
    $region23: #{tpu_custom_call.1} parent=1 // pred_check_branch
      %249 = sbr.rel (0) target = $region25
    $region24: #{tpu_custom_call.1} parent=1 // pred_region
      %s251 = ssub.s32 64, 64
      %252 = vsyncadd [#allocation4], %s251
      %s254 = sshll.u32 [#allocation7], 4
      %s255 = int_to_ptr.vmem [resolvable:$true] %s254
      %257 = dma.vmem_to_hbm [thread:$0]  %s255, 64, %s2, [#allocation4]
    $region25: #{tpu_custom_call.1} parent=1 // pred_fallthru
      _
    // Predicated region
    $region26: #{tpu_custom_call.1} parent=1 // pred_check
      _
    $region27: #{tpu_custom_call.1} parent=1 // pred_check_branch
      %259 = sbr.rel (0) target = $region29
    $region28: #{tpu_custom_call.1} parent=1 // pred_region
      %s261 = ssub.s32 64, 64
      %262 = vsyncadd [#allocation9], %s261
      %s264 = sshll.u32 [#allocation8], 4
      %s265 = int_to_ptr.vmem [resolvable:$true] %s264
      %267 = dma.vmem_to_hbm [thread:$0]  %s265, 64, %s3, [#allocation9]
    $region29: #{tpu_custom_call.1} parent=1 // pred_fallthru
      _
    // Predicated region
    $region30: #{tpu_custom_call.1} parent=1 // pred_check
      _
    $region31: #{tpu_custom_call.1} parent=1 // pred_check_branch
      %269 = sbr.rel (0) target = $region33
    $region32: #{tpu_custom_call.1} parent=1 // pred_region
      %270 = dma.done [#allocation4], 64
    $region33: #{tpu_custom_call.1} parent=1 // pred_fallthru
      _
    // Predicated region
    $region34: #{tpu_custom_call.1} parent=1 // pred_check
      _
    $region35: #{tpu_custom_call.1} parent=1 // pred_check_branch
      %272 = sbr.rel (0) target = $region37
    $region36: #{tpu_custom_call.1} parent=1 // pred_region
      %273 = dma.done [#allocation9], 64
    $region37: #{tpu_custom_call.1} parent=1 // pred_fallthru
      _
    %274 = vsyncpa [#allocation3], 1
    %275 = vsyncpa [#allocation6], 1
    %276 = vsyncpa [#allocation4], 1
    %277 = vsyncpa [#allocation9], 1

</llo_original>
